<compile_context>
chip_gen: v7x
topology: tpu7x:2x2x1
jax: 0.10.0
libtpu: 0.0.40
codegen_flags: <defaults>
</compile_context>

<pallas_src>
import functools

import jax
import jax.numpy as jnp
from jax.experimental import pallas as pl
from jax.experimental.pallas import tpu as pltpu


def _shift_left(x, s):
    """Rotate lanes left by s (callers never select the wrapped values)."""
    return jnp.concatenate([x[:, s:], x[:, :s]], axis=-1)


def _maxpool2x2_kernel(x_ref, o_ref):
    # x_ref: (TR, 2*W) -- row r = [image row 2r (W values) | image row 2r+1 (W values)]
    # o_ref: (TR, Wo)  -- Wo = W // 2
    w2 = x_ref.shape[-1]
    w = w2 // 2
    wo = o_ref.shape[-1]

    x = x_ref[...]
    # Vertical (H) pair max: the two image rows sit in the two lane halves.
    v = jnp.maximum(x[:, :w], x[:, w:])                       # (TR, W)
    # Horizontal (W) neighbour max: the pooled value lands on every even lane.
    h = jnp.maximum(v, _shift_left(v, 1))                     # (TR, W)

    # Compact even lanes 0,2,4,... down to lanes 0..Wo-1 with ceil(log2(Wo))
    # shift+select steps (pure roll/iota/where -> XLU+VPU only).
    # Invariant before step j: pooled output k lives at lane 2k - (k mod 2**j).
    y = h
    lane = jax.lax.broadcasted_iota(jnp.int32, y.shape, 1)
    j = 0
    while (1 << j) < wo:
        s = 1 << j
        src = lane + s
        take = (((src >> (j + 1)) & 1) == 1) & (src < w)
        y = jnp.where(take, _shift_left(y, s), y)
        j += 1

    o_ref[...] = y[:, :wo]


_BLOCK_IN_BYTES = 1 << 20   # ~1 MiB input block -> ~2.5 MiB VMEM with double buffering


def _pick_block_rows(nrows, row_bytes):
    cap = max(8, _BLOCK_IN_BYTES // max(1, row_bytes))
    cap = min(cap, 1024)
    cap -= cap % 8
    if nrows <= cap:
        return nrows
    for tr in range(cap, 7, -8):          # largest multiple of 8 that divides nrows
        if nrows % tr == 0:
            return tr
    # TODO(synk): pathological row counts (no multiple-of-8 divisor) fall back to a
    # single block; a ragged grid with masked edge stores would bound VMEM instead.
    return nrows


def max_pool2d_2x2(x, *, block_rows=None):
    """Equivalent of torch.nn.functional.max_pool2d(x, kernel_size=2) for NCHW."""
    N, C, H, W = x.shape
    Ho, Wo = H // 2, W // 2
    assert Ho >= 1 and Wo >= 1, "input smaller than the 2x2 pooling window"
    if H != 2 * Ho or W != 2 * Wo:        # floor mode: drop trailing row/col (torch behavior)
        x = x[:, :, : 2 * Ho, : 2 * Wo]
    W = 2 * Wo

    R = N * C * Ho
    xv = x.reshape(R, 2 * W)              # free reshape: no HBM rearrangement

    if block_rows is None:
        TR = _pick_block_rows(R, 2 * W * x.dtype.itemsize)
    else:
        TR = block_rows
        assert TR == R or (TR % 8 == 0 and R % TR == 0), "bad block_rows"

    out = pl.pallas_call(
        _maxpool2x2_kernel,
        out_shape=jax.ShapeDtypeStruct((R, Wo), x.dtype),
        grid_spec=pl.GridSpec(
            grid=(R // TR,),
            in_specs=[pl.BlockSpec((TR, 2 * W), lambda i: (i, 0))],
            out_specs=pl.BlockSpec((TR, Wo), lambda i: (i, 0)),
        ),
        compiler_params=pltpu.CompilerParams(
            dimension_semantics=("parallel",),      # pipelined + megacore-shardable (v7x)
            vmem_limit_bytes=32 * 1024 * 1024,
        ),
    )(xv)
    return out.reshape(N, C, Ho, Wo)


class Func:
    """JAX analogue of the PyTorch `Func` nn.Module: wraps an arbitrary functional."""

    def __init__(self, functional):
        self.functional = functional

    def __call__(self, *inputs):
        return self.functional(*inputs)


if __name__ == "__main__":
    key = jax.random.PRNGKey(0)
    k1, k2, k3, k4 = jax.random.split(key, 4)

    def ref_pool(x):
        n, c, h, w = x.shape
        ho, wo = h // 2, w // 2
        xc = x[:, :, : 2 * ho, : 2 * wo]
        return jnp.max(xc.reshape(n, c, ho, 2, wo, 2), axis=(3, 5))

    module = Func(max_pool2d_2x2)          # mirrors Func(lambda t: F.max_pool2d(t, 2))

    # 1) Small NCHW features (single-block path).
    x1 = jax.random.normal(k1, (2, 4, 16, 16), dtype=jnp.float32)
    y1 = jax.block_until_ready(module(x1))
    assert y1.shape == (2, 4, 8, 8) and y1.dtype == x1.dtype
    assert jnp.array_equal(y1, ref_pool(x1)), "case1 mismatch"

    # 2) Wider map: multi-program pipelined grid (grid=(4,)), lane-dense (128) output.
    x2 = jax.random.normal(k2, (1, 4, 16, 256), dtype=jnp.float32)
    mod2 = Func(functools.partial(max_pool2d_2x2, block_rows=8))
    y2 = jax.block_until_ready(mod2(x2))
    assert y2.shape == (1, 4, 8, 128)
    assert jnp.array_equal(y2, ref_pool(x2)), "case2 mismatch"

    # 3) bf16 activations stay bf16 (memory-bound: halves HBM traffic).
    x3 = jax.random.normal(k3, (2, 4, 16, 16), dtype=jnp.bfloat16)
    y3 = jax.block_until_ready(module(x3))
    assert y3.dtype == jnp.bfloat16
    assert jnp.array_equal(y3, ref_pool(x3)), "case3 mismatch"

    # 4) Odd spatial dims follow torch floor mode (trailing row/col dropped).
    x4 = jax.random.normal(k4, (1, 2, 7, 9), dtype=jnp.float32)
    y4 = jax.block_until_ready(module(x4))
    assert y4.shape == (1, 2, 3, 4)
    assert jnp.array_equal(y4, ref_pool(x4)), "case4 mismatch"

    print("KERNEL_OK")
</pallas_src>

<mosaic_0001>
module attributes {stable_mosaic.version = 11 : i64} {
  func.func @_maxpool2x2_kernel(%arg0: i32, %arg1: memref<64x32xf32, #tpu.memory_space<vmem>>, %arg2: memref<64x8xf32, #tpu.memory_space<vmem>>) attributes {dimension_semantics = [#tpu.dimension_semantics<parallel>], iteration_bounds = array<i64: 1>, scalar_prefetch = 0 : i64, scratch_operands = 0 : i64, tpu.core_type = #tpu.core_type<tc>, window_params = [{transform_indices = @transform_0, window_bounds = array<i64: 64, 32>}, {transform_indices = @transform_1, window_bounds = array<i64: 64, 8>}]} {
    %c0 = arith.constant 0 : index
    %c0_0 = arith.constant 0 : index
    %0 = vector.load %arg1[%c0, %c0_0] : memref<64x32xf32, #tpu.memory_space<vmem>>, vector<64x32xf32>
    %1 = vector.extract_strided_slice %0 {offsets = [0, 0], sizes = [64, 16], strides = [1, 1]} : vector<64x32xf32> to vector<64x16xf32>
    %2 = vector.extract_strided_slice %0 {offsets = [0, 16], sizes = [64, 16], strides = [1, 1]} : vector<64x32xf32> to vector<64x16xf32>
    %3 = arith.maximumf %1, %2 : vector<64x16xf32>
    %4 = vector.extract_strided_slice %3 {offsets = [0, 1], sizes = [64, 15], strides = [1, 1]} : vector<64x16xf32> to vector<64x15xf32>
    %5 = vector.extract_strided_slice %3 {offsets = [0, 0], sizes = [64, 1], strides = [1, 1]} : vector<64x16xf32> to vector<64x1xf32>
    %6 = tpu.concatenate %4, %5 in 1 : vector<64x15xf32>, vector<64x1xf32> -> vector<64x16xf32>
    %7 = arith.maximumf %3, %6 : vector<64x16xf32>
    %8 = tpu.iota {dimensions = array<i32: 1>} : vector<64x16xi32>
    %c1_i32 = arith.constant 1 : i32
    %9 = vector.broadcast %c1_i32 : i32 to vector<64x16xi32>
    %10 = arith.addi %8, %9 : vector<64x16xi32>
    %c1_i32_1 = arith.constant 1 : i32
    %11 = vector.broadcast %c1_i32_1 : i32 to vector<64x16xi32>
    %12 = arith.shrsi %10, %11 : vector<64x16xi32>
    %c1_i32_2 = arith.constant 1 : i32
    %13 = vector.broadcast %c1_i32_2 : i32 to vector<64x16xi32>
    %14 = arith.andi %12, %13 : vector<64x16xi32>
    %c1_i32_3 = arith.constant 1 : i32
    %15 = vector.broadcast %c1_i32_3 : i32 to vector<64x16xi32>
    %16 = arith.cmpi eq, %14, %15 : vector<64x16xi32>
    %c16_i32 = arith.constant 16 : i32
    %17 = vector.broadcast %c16_i32 : i32 to vector<64x16xi32>
    %18 = arith.cmpi slt, %10, %17 : vector<64x16xi32>
    %19 = arith.andi %16, %18 : vector<64x16xi1>
    %20 = vector.extract_strided_slice %7 {offsets = [0, 1], sizes = [64, 15], strides = [1, 1]} : vector<64x16xf32> to vector<64x15xf32>
    %21 = vector.extract_strided_slice %7 {offsets = [0, 0], sizes = [64, 1], strides = [1, 1]} : vector<64x16xf32> to vector<64x1xf32>
    %22 = tpu.concatenate %20, %21 in 1 : vector<64x15xf32>, vector<64x1xf32> -> vector<64x16xf32>
    %23 = arith.select %19, %22, %7 : vector<64x16xi1>, vector<64x16xf32>
    %c2_i32 = arith.constant 2 : i32
    %24 = vector.broadcast %c2_i32 : i32 to vector<64x16xi32>
    %25 = arith.addi %8, %24 : vector<64x16xi32>
    %c2_i32_4 = arith.constant 2 : i32
    %26 = vector.broadcast %c2_i32_4 : i32 to vector<64x16xi32>
    %27 = arith.shrsi %25, %26 : vector<64x16xi32>
    %c1_i32_5 = arith.constant 1 : i32
    %28 = vector.broadcast %c1_i32_5 : i32 to vector<64x16xi32>
    %29 = arith.andi %27, %28 : vector<64x16xi32>
    %c1_i32_6 = arith.constant 1 : i32
    %30 = vector.broadcast %c1_i32_6 : i32 to vector<64x16xi32>
    %31 = arith.cmpi eq, %29, %30 : vector<64x16xi32>
    %c16_i32_7 = arith.constant 16 : i32
    %32 = vector.broadcast %c16_i32_7 : i32 to vector<64x16xi32>
    %33 = arith.cmpi slt, %25, %32 : vector<64x16xi32>
    %34 = arith.andi %31, %33 : vector<64x16xi1>
    %35 = vector.extract_strided_slice %23 {offsets = [0, 2], sizes = [64, 14], strides = [1, 1]} : vector<64x16xf32> to vector<64x14xf32>
    %36 = vector.extract_strided_slice %23 {offsets = [0, 0], sizes = [64, 2], strides = [1, 1]} : vector<64x16xf32> to vector<64x2xf32>
    %37 = tpu.concatenate %35, %36 in 1 : vector<64x14xf32>, vector<64x2xf32> -> vector<64x16xf32>
    %38 = arith.select %34, %37, %23 : vector<64x16xi1>, vector<64x16xf32>
    %c4_i32 = arith.constant 4 : i32
    %39 = vector.broadcast %c4_i32 : i32 to vector<64x16xi32>
    %40 = arith.addi %8, %39 : vector<64x16xi32>
    %c3_i32 = arith.constant 3 : i32
    %41 = vector.broadcast %c3_i32 : i32 to vector<64x16xi32>
    %42 = arith.shrsi %40, %41 : vector<64x16xi32>
    %c1_i32_8 = arith.constant 1 : i32
    %43 = vector.broadcast %c1_i32_8 : i32 to vector<64x16xi32>
    %44 = arith.andi %42, %43 : vector<64x16xi32>
    %c1_i32_9 = arith.constant 1 : i32
    %45 = vector.broadcast %c1_i32_9 : i32 to vector<64x16xi32>
    %46 = arith.cmpi eq, %44, %45 : vector<64x16xi32>
    %c16_i32_10 = arith.constant 16 : i32
    %47 = vector.broadcast %c16_i32_10 : i32 to vector<64x16xi32>
    %48 = arith.cmpi slt, %40, %47 : vector<64x16xi32>
    %49 = arith.andi %46, %48 : vector<64x16xi1>
    %50 = vector.extract_strided_slice %38 {offsets = [0, 4], sizes = [64, 12], strides = [1, 1]} : vector<64x16xf32> to vector<64x12xf32>
    %51 = vector.extract_strided_slice %38 {offsets = [0, 0], sizes = [64, 4], strides = [1, 1]} : vector<64x16xf32> to vector<64x4xf32>
    %52 = tpu.concatenate %50, %51 in 1 : vector<64x12xf32>, vector<64x4xf32> -> vector<64x16xf32>
    %53 = arith.select %49, %52, %38 : vector<64x16xi1>, vector<64x16xf32>
    %54 = vector.extract_strided_slice %53 {offsets = [0, 0], sizes = [64, 8], strides = [1, 1]} : vector<64x16xf32> to vector<64x8xf32>
    %c0_11 = arith.constant 0 : index
    %c0_12 = arith.constant 0 : index
    %55 = vector.load %arg2[%c0_11, %c0_12] : memref<64x8xf32, #tpu.memory_space<vmem>>, vector<64x8xf32>
    tpu.vector_store %arg2[%c0_11, %c0_12], %54 {strides = array<i32>} : memref<64x8xf32, #tpu.memory_space<vmem>>, vector<64x8xf32>,
    return
  }
  func.func @transform_0(%arg0: i32) -> (i32, i32) {
    %c0_i32 = arith.constant 0 : i32
    %c0_i32_0 = arith.constant 0 : i32
    return %arg0, %c0_i32 : i32, i32
  }
  func.func @transform_1(%arg0: i32) -> (i32, i32) {
    %c0_i32 = arith.constant 0 : i32
    %c0_i32_0 = arith.constant 0 : i32
    return %arg0, %c0_i32 : i32, i32
  }
}

</mosaic_0001>

<llo_original>
// kernel: tpu_custom_call.1
$region0: #{tpu_custom_call.1}
  #allocation0 [shape = 'u32[]', space=smem, size = 0x4, offset = 0x4, fixed_abs, tag = 'smem constant byte address 0x4 - core index']
  #allocation1 [shape = 'u32[144,128]{1,0:T(1,128)}', space=vmem, size = 0x12000, scoped, tag = 'internal scratch']
  %s0 = inlined_call_operand.vmem [shape: f32[64,32], index: 0, kind: input, shape index: {}]
  %s1 = inlined_call_operand.vmem [shape: f32[64,8], index: 1, kind: output, shape index: {}]
  %s2 = sld [smem:[#allocation0]]
  $region14: #{tpu_custom_call.1} parent=0
    _
  %s4 = ssub.s32 1, %s2
  %s5 = scalar_select 0, %s4, %s2
  // Predicated region
  $region2: #{tpu_custom_call.1} parent=0 // pred_check
    _
  $region3: #{tpu_custom_call.1} parent=0 // pred_check_branch
    %7 = sbr.rel (0) target = $region5
  $region4: #{tpu_custom_call.1} parent=0 // pred_region
    _
  $region5: #{tpu_custom_call.1} parent=0 // pred_fallthru
    _
  %v8 = vld [vmem:[%s0] sm:$0xff]
  %v9 = vld [vmem:[%s0 + $0x8] sm:$0xff]
  %v10 = vld [vmem:[%s0 + $0x10] sm:$0xff]
  %v11 = vld [vmem:[%s0 + $0x18] sm:$0xff]
  %v12 = vld [vmem:[%s0 + $0x20] sm:$0xff]
  %v13 = vld [vmem:[%s0 + $0x28] sm:$0xff]
  %v14 = vld [vmem:[%s0 + $0x30] sm:$0xff]
  %v15 = vld [vmem:[%s0 + $0x38] sm:$0xff]
  %24 = vrot.lane.b32.xlu0 %v8, 112
  %v25 = vpop.permute.xlu0 %24
  %26 = vrot.lane.b32.xlu0 %v9, 112
  %v27 = vpop.permute.xlu0 %26
  %28 = vrot.lane.b32.xlu0 %v10, 112
  %v29 = vpop.permute.xlu0 %28
  %30 = vrot.lane.b32.xlu0 %v11, 112
  %v31 = vpop.permute.xlu0 %30
  %32 = vrot.lane.b32.xlu0 %v12, 112
  %v33 = vpop.permute.xlu0 %32
  %34 = vrot.lane.b32.xlu0 %v13, 112
  %v35 = vpop.permute.xlu0 %34
  %36 = vrot.lane.b32.xlu0 %v14, 112
  %v37 = vpop.permute.xlu0 %36
  %38 = vrot.lane.b32.xlu0 %v15, 112
  %v39 = vpop.permute.xlu0 %38
  %v48 = vmax.f32 %v8, %v25
  %v49 = vmax.f32 %v9, %v27
  %v50 = vmax.f32 %v10, %v29
  %v51 = vmax.f32 %v11, %v31
  %v52 = vmax.f32 %v12, %v33
  %v53 = vmax.f32 %v13, %v35
  %v54 = vmax.f32 %v14, %v37
  %v55 = vmax.f32 %v15, %v39
  %64 = vrot.lane.b32.xlu0 %v48, 127
  %v65 = vpop.permute.xlu0 %64
  %66 = vrot.lane.b32.xlu0 %v49, 127
  %v67 = vpop.permute.xlu0 %66
  %68 = vrot.lane.b32.xlu0 %v50, 127
  %v69 = vpop.permute.xlu0 %68
  %70 = vrot.lane.b32.xlu0 %v51, 127
  %v71 = vpop.permute.xlu0 %70
  %72 = vrot.lane.b32.xlu0 %v52, 127
  %v73 = vpop.permute.xlu0 %72
  %74 = vrot.lane.b32.xlu0 %v53, 127
  %v75 = vpop.permute.xlu0 %74
  %76 = vrot.lane.b32.xlu0 %v54, 127
  %v77 = vpop.permute.xlu0 %76
  %78 = vrot.lane.b32.xlu0 %v55, 127
  %v79 = vpop.permute.xlu0 %78
  %88 = vrot.lane.b32.xlu0 %v48, 15
  %v89 = vpop.permute.xlu0 %88
  %90 = vrot.lane.b32.xlu0 %v49, 15
  %v91 = vpop.permute.xlu0 %90
  %92 = vrot.lane.b32.xlu0 %v50, 15
  %v93 = vpop.permute.xlu0 %92
  %94 = vrot.lane.b32.xlu0 %v51, 15
  %v95 = vpop.permute.xlu0 %94
  %96 = vrot.lane.b32.xlu0 %v52, 15
  %v97 = vpop.permute.xlu0 %96
  %98 = vrot.lane.b32.xlu0 %v53, 15
  %v99 = vpop.permute.xlu0 %98
  %100 = vrot.lane.b32.xlu0 %v54, 15
  %v101 = vpop.permute.xlu0 %100
  %102 = vrot.lane.b32.xlu0 %v55, 15
  %v103 = vpop.permute.xlu0 %102
  %vm112 = vcmask 121856
  %v113 = vsel %vm112, %v65, %v89
  %v114 = vsel %vm112, %v67, %v91
  %v115 = vsel %vm112, %v69, %v93
  %v116 = vsel %vm112, %v71, %v95
  %v117 = vsel %vm112, %v73, %v97
  %v118 = vsel %vm112, %v75, %v99
  %v119 = vsel %vm112, %v77, %v101
  %v120 = vsel %vm112, %v79, %v103
  %v121 = vmax.f32 %v48, %v113
  %v122 = vmax.f32 %v49, %v114
  %v123 = vmax.f32 %v50, %v115
  %v124 = vmax.f32 %v51, %v116
  %v125 = vmax.f32 %v52, %v117
  %v126 = vmax.f32 %v53, %v118
  %v127 = vmax.f32 %v54, %v119
  %v128 = vmax.f32 %v55, %v120
  %v129 = vlaneseq
  %v130 = vand.u32 %v129, 127
  %v131 = vadd.s32 %v130, 1
  %v132 = vshra.s32 %v131, 1
  %v133 = vand.u32 %v132, 1
  %vm134 = vcmp.eq.s32.totalorder %v133, 1
  %vm135 = vcmp.lt.s32.totalorder %v131, 16
  %vm136 = vmand %vm134, %vm135
  %145 = vrot.lane.b32.xlu0 %v121, 127
  %v146 = vpop.permute.xlu0 %145
  %147 = vrot.lane.b32.xlu0 %v122, 127
  %v148 = vpop.permute.xlu0 %147
  %149 = vrot.lane.b32.xlu0 %v123, 127
  %v150 = vpop.permute.xlu0 %149
  %151 = vrot.lane.b32.xlu0 %v124, 127
  %v152 = vpop.permute.xlu0 %151
  %153 = vrot.lane.b32.xlu0 %v125, 127
  %v154 = vpop.permute.xlu0 %153
  %155 = vrot.lane.b32.xlu0 %v126, 127
  %v156 = vpop.permute.xlu0 %155
  %157 = vrot.lane.b32.xlu0 %v127, 127
  %v158 = vpop.permute.xlu0 %157
  %159 = vrot.lane.b32.xlu0 %v128, 127
  %v160 = vpop.permute.xlu0 %159
  %169 = vrot.lane.b32.xlu0 %v121, 15
  %v170 = vpop.permute.xlu0 %169
  %171 = vrot.lane.b32.xlu0 %v122, 15
  %v172 = vpop.permute.xlu0 %171
  %173 = vrot.lane.b32.xlu0 %v123, 15
  %v174 = vpop.permute.xlu0 %173
  %175 = vrot.lane.b32.xlu0 %v124, 15
  %v176 = vpop.permute.xlu0 %175
  %177 = vrot.lane.b32.xlu0 %v125, 15
  %v178 = vpop.permute.xlu0 %177
  %179 = vrot.lane.b32.xlu0 %v126, 15
  %v180 = vpop.permute.xlu0 %179
  %181 = vrot.lane.b32.xlu0 %v127, 15
  %v182 = vpop.permute.xlu0 %181
  %183 = vrot.lane.b32.xlu0 %v128, 15
  %v184 = vpop.permute.xlu0 %183
  %v193 = vsel %vm112, %v146, %v170
  %v194 = vsel %vm112, %v148, %v172
  %v195 = vsel %vm112, %v150, %v174
  %v196 = vsel %vm112, %v152, %v176
  %v197 = vsel %vm112, %v154, %v178
  %v198 = vsel %vm112, %v156, %v180
  %v199 = vsel %vm112, %v158, %v182
  %v200 = vsel %vm112, %v160, %v184
  %v201 = vsel %vm136, %v193, %v121
  %v202 = vsel %vm136, %v194, %v122
  %v203 = vsel %vm136, %v195, %v123
  %v204 = vsel %vm136, %v196, %v124
  %v205 = vsel %vm136, %v197, %v125
  %v206 = vsel %vm136, %v198, %v126
  %v207 = vsel %vm136, %v199, %v127
  %v208 = vsel %vm136, %v200, %v128
  %v209 = vadd.s32 %v130, 2
  %v210 = vshra.s32 %v209, 2
  %v211 = vand.u32 %v210, 1
  %vm212 = vcmp.eq.s32.totalorder %v211, 1
  %vm213 = vcmp.lt.s32.totalorder %v209, 16
  %vm214 = vmand %vm212, %vm213
  %223 = vrot.lane.b32.xlu0 %v201, 126
  %v224 = vpop.permute.xlu0 %223
  %225 = vrot.lane.b32.xlu0 %v202, 126
  %v226 = vpop.permute.xlu0 %225
  %227 = vrot.lane.b32.xlu0 %v203, 126
  %v228 = vpop.permute.xlu0 %227
  %229 = vrot.lane.b32.xlu0 %v204, 126
  %v230 = vpop.permute.xlu0 %229
  %231 = vrot.lane.b32.xlu0 %v205, 126
  %v232 = vpop.permute.xlu0 %231
  %233 = vrot.lane.b32.xlu0 %v206, 126
  %v234 = vpop.permute.xlu0 %233
  %235 = vrot.lane.b32.xlu0 %v207, 126
  %v236 = vpop.permute.xlu0 %235
  %237 = vrot.lane.b32.xlu0 %v208, 126
  %v238 = vpop.permute.xlu0 %237
  %247 = vrot.lane.b32.xlu0 %v201, 14
  %v248 = vpop.permute.xlu0 %247
  %249 = vrot.lane.b32.xlu0 %v202, 14
  %v250 = vpop.permute.xlu0 %249
  %251 = vrot.lane.b32.xlu0 %v203, 14
  %v252 = vpop.permute.xlu0 %251
  %253 = vrot.lane.b32.xlu0 %v204, 14
  %v254 = vpop.permute.xlu0 %253
  %255 = vrot.lane.b32.xlu0 %v205, 14
  %v256 = vpop.permute.xlu0 %255
  %257 = vrot.lane.b32.xlu0 %v206, 14
  %v258 = vpop.permute.xlu0 %257
  %259 = vrot.lane.b32.xlu0 %v207, 14
  %v260 = vpop.permute.xlu0 %259
  %261 = vrot.lane.b32.xlu0 %v208, 14
  %v262 = vpop.permute.xlu0 %261
  %vm271 = vcmask 113664
  %v272 = vsel %vm271, %v224, %v248
  %v273 = vsel %vm271, %v226, %v250
  %v274 = vsel %vm271, %v228, %v252
  %v275 = vsel %vm271, %v230, %v254
  %v276 = vsel %vm271, %v232, %v256
  %v277 = vsel %vm271, %v234, %v258
  %v278 = vsel %vm271, %v236, %v260
  %v279 = vsel %vm271, %v238, %v262
  %v280 = vsel %vm214, %v272, %v201
  %v281 = vsel %vm214, %v273, %v202
  %v282 = vsel %vm214, %v274, %v203
  %v283 = vsel %vm214, %v275, %v204
  %v284 = vsel %vm214, %v276, %v205
  %v285 = vsel %vm214, %v277, %v206
  %v286 = vsel %vm214, %v278, %v207
  %v287 = vsel %vm214, %v279, %v208
  %v288 = vadd.s32 %v130, 4
  %v289 = vshra.s32 %v288, 3
  %v290 = vand.u32 %v289, 1
  %vm291 = vcmp.eq.s32.totalorder %v290, 1
  %vm292 = vcmp.lt.s32.totalorder %v288, 16
  %vm293 = vmand %vm291, %vm292
  %302 = vrot.lane.b32.xlu0 %v280, 124
  %v303 = vpop.permute.xlu0 %302
  %304 = vrot.lane.b32.xlu0 %v281, 124
  %v305 = vpop.permute.xlu0 %304
  %306 = vrot.lane.b32.xlu0 %v282, 124
  %v307 = vpop.permute.xlu0 %306
  %308 = vrot.lane.b32.xlu0 %v283, 124
  %v309 = vpop.permute.xlu0 %308
  %310 = vrot.lane.b32.xlu0 %v284, 124
  %v311 = vpop.permute.xlu0 %310
  %312 = vrot.lane.b32.xlu0 %v285, 124
  %v313 = vpop.permute.xlu0 %312
  %314 = vrot.lane.b32.xlu0 %v286, 124
  %v315 = vpop.permute.xlu0 %314
  %316 = vrot.lane.b32.xlu0 %v287, 124
  %v317 = vpop.permute.xlu0 %316
  %326 = vrot.lane.b32.xlu0 %v280, 12
  %v327 = vpop.permute.xlu0 %326
  %328 = vrot.lane.b32.xlu0 %v281, 12
  %v329 = vpop.permute.xlu0 %328
  %330 = vrot.lane.b32.xlu0 %v282, 12
  %v331 = vpop.permute.xlu0 %330
  %332 = vrot.lane.b32.xlu0 %v283, 12
  %v333 = vpop.permute.xlu0 %332
  %334 = vrot.lane.b32.xlu0 %v284, 12
  %v335 = vpop.permute.xlu0 %334
  %336 = vrot.lane.b32.xlu0 %v285, 12
  %v337 = vpop.permute.xlu0 %336
  %338 = vrot.lane.b32.xlu0 %v286, 12
  %v339 = vpop.permute.xlu0 %338
  %340 = vrot.lane.b32.xlu0 %v287, 12
  %v341 = vpop.permute.xlu0 %340
  %vm350 = vcmask 97280
  %v351 = vsel %vm350, %v303, %v327
  %v352 = vsel %vm350, %v305, %v329
  %v353 = vsel %vm350, %v307, %v331
  %v354 = vsel %vm350, %v309, %v333
  %v355 = vsel %vm350, %v311, %v335
  %v356 = vsel %vm350, %v313, %v337
  %v357 = vsel %vm350, %v315, %v339
  %v358 = vsel %vm350, %v317, %v341
  %v359 = vsel %vm293, %v351, %v280
  %v360 = vsel %vm293, %v352, %v281
  %v361 = vsel %vm293, %v353, %v282
  %v362 = vsel %vm293, %v354, %v283
  %v363 = vsel %vm293, %v355, %v284
  %v364 = vsel %vm293, %v356, %v285
  %v365 = vsel %vm293, %v357, %v286
  %v366 = vsel %vm293, %v358, %v287
  %vm367 = vcmask 64512
  %368 = vst.msk [vmem:[%s1] sm:$0xff] %vm367, %v359
  %369 = vst.msk [vmem:[%s1 + $0x8] sm:$0xff] %vm367, %v360
  %370 = vst.msk [vmem:[%s1 + $0x10] sm:$0xff] %vm367, %v361
  %371 = vst.msk [vmem:[%s1 + $0x18] sm:$0xff] %vm367, %v362
  %372 = vst.msk [vmem:[%s1 + $0x20] sm:$0xff] %vm367, %v363
  %373 = vst.msk [vmem:[%s1 + $0x28] sm:$0xff] %vm367, %v364
  %374 = vst.msk [vmem:[%s1 + $0x30] sm:$0xff] %vm367, %v365
  %375 = vst.msk [vmem:[%s1 + $0x38] sm:$0xff] %vm367, %v366
  // Predicated region
  $region6: #{tpu_custom_call.1} parent=0 // pred_check
    _
  $region7: #{tpu_custom_call.1} parent=0 // pred_check_branch
    %377 = sbr.rel (0) target = $region9
  $region8: #{tpu_custom_call.1} parent=0 // pred_region
    _
  $region9: #{tpu_custom_call.1} parent=0 // pred_fallthru
    _
  // Predicated region
  $region10: #{tpu_custom_call.1} parent=0 // pred_check
    _
  $region11: #{tpu_custom_call.1} parent=0 // pred_check_branch
    %379 = sbr.rel (0) target = $region13
  $region12: #{tpu_custom_call.1} parent=0 // pred_region
    _
  $region13: #{tpu_custom_call.1} parent=0 // pred_fallthru
    _

</llo_original>
